<compile_context>
chip_gen: v7x
topology: tpu7x:2x2x1
jax: 0.10.0
libtpu: 0.0.40
codegen_flags: <defaults>
</compile_context>

<pallas_src>
import jax
import jax.numpy as jnp
from jax.experimental import pallas as pl
from jax.experimental.pallas import tpu as pltpu

LANE = 128  # lane-dense head output width


def gnn_boundary_classifier(a, x, params, *, graphs_per_step=None):
    """a: (B, N, N) row-normalized adjacency, x: (B, N, Fin) -> (B, N, 2) logits."""
    w1l, b1, w1r, w2l, b2, w2r, wlin, blin = params
    bsz, n, fin = x.shape
    h = w1l.shape[1]
    nout = wlin.shape[1]

    if graphs_per_step is None:
        graphs_per_step = bsz           # collapse the whole batch into one step
    g = graphs_per_step
    assert bsz % g == 0
    n_steps = bsz // g

    # ---- bf16 MXU operands (f32 accumulation in-kernel), f32 biases --------
    a_bf = a.astype(jnp.bfloat16)
    x_bf = x.astype(jnp.bfloat16)
    w1l_bf = w1l.astype(jnp.bfloat16)
    w1r_bf = w1r.astype(jnp.bfloat16)
    w2l_bf = w2l.astype(jnp.bfloat16)
    w2r_bf = w2r.astype(jnp.bfloat16)
    w3_bf = jnp.zeros((h, LANE), jnp.bfloat16).at[:, :nout].set(
        wlin.astype(jnp.bfloat16))
    b1_f = b1.astype(jnp.float32)
    b2_f = b2.astype(jnp.float32)
    b3_f = jnp.zeros((1, LANE), jnp.float32).at[:, :nout].set(blin)

    def kernel(a_ref, x_ref, w1l_ref, w1r_ref, w2l_ref, w2r_ref,
               b1_ref, b2_ref, w3_ref, b3_ref, out_ref):
        a_t = a_ref[...]                                   # (G, N, N)   bf16
        x_t = x_ref[...]                                   # (G, N, Fin) bf16
        x_flat = x_t.reshape(g * n, fin)                   # (G*N, Fin)

        # ---- SAGEConv 1: per-graph mean agg + flattened linear + ReLU ----
        agg1 = jnp.einsum('gij,gjf->gif', a_t, x_t,
                          preferred_element_type=jnp.float32)
        agg1_flat = agg1.reshape(g * n, fin).astype(jnp.bfloat16)
        h1 = jnp.maximum(
            jnp.dot(agg1_flat, w1l_ref[...], preferred_element_type=jnp.float32)
            + jnp.dot(x_flat, w1r_ref[...], preferred_element_type=jnp.float32)
            + b1_ref[...], 0.0)                            # (G*N, H) f32
        h1_bf = h1.astype(jnp.bfloat16)

        # ---- SAGEConv 2 ----
        agg2 = jnp.einsum('gij,gjf->gif', a_t, h1_bf.reshape(g, n, h),
                          preferred_element_type=jnp.float32)
        agg2_flat = agg2.reshape(g * n, h).astype(jnp.bfloat16)
        h2 = jnp.maximum(
            jnp.dot(agg2_flat, w2l_ref[...], preferred_element_type=jnp.float32)
            + jnp.dot(h1_bf, w2r_ref[...], preferred_element_type=jnp.float32)
            + b2_ref[...], 0.0)                            # (G*N, H) f32

        # ---- Linear head, lane-dense (G*N, 128) store ----
        out_ref[...] = (jnp.dot(h2.astype(jnp.bfloat16), w3_ref[...],
                                preferred_element_type=jnp.float32)
                        + b3_ref[...])

    flops = (2 * bsz * n * n * fin          # agg1
             + 4 * bsz * n * fin * h        # conv1 lin_l + lin_r
             + 2 * bsz * n * n * h          # agg2
             + 4 * bsz * n * h * h          # conv2 lin_l + lin_r
             + 2 * bsz * n * h * LANE)      # head (padded, advisory only)
    bytes_accessed = (2 * (a_bf.size + x_bf.size + w1l_bf.size + w1r_bf.size
                           + w2l_bf.size + w2r_bf.size + w3_bf.size)
                      + 4 * (b1_f.size + b2_f.size + b3_f.size
                             + bsz * n * LANE))

    out_flat = pl.pallas_call(
        kernel,
        out_shape=jax.ShapeDtypeStruct((bsz * n, LANE), jnp.float32),
        grid_spec=pltpu.PrefetchScalarGridSpec(
            num_scalar_prefetch=0,
            grid=(n_steps,),
            in_specs=[
                pl.BlockSpec((g, n, n), lambda s: (s, 0, 0)),     # A  (per group)
                pl.BlockSpec((g, n, fin), lambda s: (s, 0, 0)),   # x  (per group)
                pl.BlockSpec((fin, h), lambda s: (0, 0)),         # W1_l (resident)
                pl.BlockSpec((fin, h), lambda s: (0, 0)),         # W1_r
                pl.BlockSpec((h, h), lambda s: (0, 0)),           # W2_l
                pl.BlockSpec((h, h), lambda s: (0, 0)),           # W2_r
                pl.BlockSpec((1, h), lambda s: (0, 0)),           # b1 (f32)
                pl.BlockSpec((1, h), lambda s: (0, 0)),           # b2 (f32)
                pl.BlockSpec((h, LANE), lambda s: (0, 0)),        # W3 (lane-padded)
                pl.BlockSpec((1, LANE), lambda s: (0, 0)),        # b3 (lane-padded)
            ],
            out_specs=pl.BlockSpec((g * n, LANE), lambda s: (s, 0)),
        ),
        compiler_params=pltpu.CompilerParams(
            # Only matters when graphs_per_step < B (then shards groups across
            # TensorCores on multi-TC parts).
            dimension_semantics=("parallel",),
        ),
        cost_estimate=pl.CostEstimate(
            flops=flops, transcendentals=0, bytes_accessed=bytes_accessed),
    )(a_bf, x_bf, w1l_bf, w1r_bf, w2l_bf, w2r_bf, b1_f, b2_f, w3_bf, b3_f)

    return out_flat.reshape(bsz, n, LANE)[..., :nout]


def build_mean_adjacency(edge_index, num_nodes):
    """Dense row-normalized adjacency for mean aggregation of source -> target."""
    src, dst = edge_index[0], edge_index[1]
    adj = jnp.zeros((num_nodes, num_nodes), jnp.float32).at[dst, src].add(1.0)
    deg = jnp.clip(adj.sum(axis=1, keepdims=True), 1.0, None)
    return adj / deg


def reference_forward(a, x, params):
    """Pure-JAX f32 reference (batched)."""
    w1l, b1, w1r, w2l, b2, w2r, wlin, blin = params
    h1 = jnp.maximum((a @ x) @ w1l + b1 + x @ w1r, 0.0)
    h2 = jnp.maximum((a @ h1) @ w2l + b2 + h1 @ w2r, 0.0)
    return h2 @ wlin + blin


# TODO(synk): for realistic large sparse graphs, replace the dense O(N^2)
# adjacency matmul with a CSR gather aggregation via PrefetchScalarGridSpec,
# tile A over a source-node ("arbitrary") grid axis with a VMEM f32
# accumulator, and set vmem_limit_bytes per generation (v7x: 64 MiB physical).

if __name__ == "__main__":
    B, N, IN_DIM, HIDDEN, NOUT = 4, 16, 8, 64, 2

    key = jax.random.PRNGKey(0)
    keys = jax.random.split(key, 10)

    # Batched node features.
    x = jax.random.normal(keys[0], (B, N, IN_DIM), jnp.float32)

    # Deterministic per-graph topology: bidirectional ring + a few random chords.
    ring_src = jnp.arange(N)
    ring_dst = (jnp.arange(N) + 1) % N
    a_list = []
    for gidx in range(B):
        kg1, kg2 = jax.random.split(jax.random.fold_in(keys[1], gidx))
        extra_src = jax.random.randint(kg1, (8,), 0, N)
        extra_dst = jax.random.randint(kg2, (8,), 0, N)
        src = jnp.concatenate([ring_src, ring_dst, extra_src])
        dst = jnp.concatenate([ring_dst, ring_src, extra_dst])
        a_list.append(build_mean_adjacency(jnp.stack([src, dst], axis=0), N))
    a = jnp.stack(a_list, axis=0)                       # (B, N, N)

    # Deterministic parameters (weights pre-transposed to [in, out]).
    def init(k, shape, scale=0.1):
        return scale * jax.random.normal(k, shape, jnp.float32)

    params = (
        init(keys[2], (IN_DIM, HIDDEN)),   # conv1.lin_l weight^T
        init(keys[3], (1, HIDDEN)),        # conv1.lin_l bias
        init(keys[4], (IN_DIM, HIDDEN)),   # conv1.lin_r weight^T (no bias)
        init(keys[5], (HIDDEN, HIDDEN)),   # conv2.lin_l weight^T
        init(keys[6], (1, HIDDEN)),        # conv2.lin_l bias
        init(keys[7], (HIDDEN, HIDDEN)),   # conv2.lin_r weight^T (no bias)
        init(keys[8], (HIDDEN, NOUT)),     # lin weight^T
        init(keys[9], (1, NOUT)),          # lin bias
    )

    out = gnn_boundary_classifier(a, x, params)
    out = jax.block_until_ready(out)

    ref = reference_forward(a, x, params)
    assert out.shape == (B, N, NOUT)
    # bf16 MXU operands with f32 accumulation -> bf16-appropriate tolerance.
    assert jnp.allclose(out, ref, atol=2e-2, rtol=2e-2), (
        float(jnp.max(jnp.abs(out - ref))))

    print("KERNEL_OK")
</pallas_src>

<mosaic_0001>
module attributes {stable_mosaic.version = 11 : i64} {
  func.func @kernel(%arg0: i32, %arg1: memref<4x16x16xbf16, #tpu.memory_space<vmem>>, %arg2: memref<4x16x8xbf16, #tpu.memory_space<vmem>>, %arg3: memref<8x64xbf16, #tpu.memory_space<vmem>>, %arg4: memref<8x64xbf16, #tpu.memory_space<vmem>>, %arg5: memref<64x64xbf16, #tpu.memory_space<vmem>>, %arg6: memref<64x64xbf16, #tpu.memory_space<vmem>>, %arg7: memref<1x64xf32, #tpu.memory_space<vmem>>, %arg8: memref<1x64xf32, #tpu.memory_space<vmem>>, %arg9: memref<64x128xbf16, #tpu.memory_space<vmem>>, %arg10: memref<1x128xf32, #tpu.memory_space<vmem>>, %arg11: memref<64x128xf32, #tpu.memory_space<vmem>>) attributes {dimension_semantics = [#tpu.dimension_semantics<parallel>], iteration_bounds = array<i64: 1>, scalar_prefetch = 0 : i64, scratch_operands = 0 : i64, tpu.core_type = #tpu.core_type<tc>, window_params = [{transform_indices = @transform_0, window_bounds = array<i64: 4, 16, 16>}, {transform_indices = @transform_1, window_bounds = array<i64: 4, 16, 8>}, {pipeline_mode = #tpu.pipeline_mode<synchronous>, transform_indices = @transform_2, window_bounds = array<i64: 8, 64>}, {pipeline_mode = #tpu.pipeline_mode<synchronous>, transform_indices = @transform_3, window_bounds = array<i64: 8, 64>}, {pipeline_mode = #tpu.pipeline_mode<synchronous>, transform_indices = @transform_4, window_bounds = array<i64: 64, 64>}, {pipeline_mode = #tpu.pipeline_mode<synchronous>, transform_indices = @transform_5, window_bounds = array<i64: 64, 64>}, {pipeline_mode = #tpu.pipeline_mode<synchronous>, transform_indices = @transform_6, window_bounds = array<i64: 1, 64>}, {pipeline_mode = #tpu.pipeline_mode<synchronous>, transform_indices = @transform_7, window_bounds = array<i64: 1, 64>}, {pipeline_mode = #tpu.pipeline_mode<synchronous>, transform_indices = @transform_8, window_bounds = array<i64: 64, 128>}, {pipeline_mode = #tpu.pipeline_mode<synchronous>, transform_indices = @transform_9, window_bounds = array<i64: 1, 128>}, {transform_indices = @transform_10, window_bounds = array<i64: 64, 128>}]} {
    %c0 = arith.constant 0 : index
    %c0_0 = arith.constant 0 : index
    %c0_1 = arith.constant 0 : index
    %0 = vector.load %arg1[%c0, %c0_0, %c0_1] : memref<4x16x16xbf16, #tpu.memory_space<vmem>>, vector<4x16x16xbf16>
    %c0_2 = arith.constant 0 : index
    %c0_3 = arith.constant 0 : index
    %c0_4 = arith.constant 0 : index
    %1 = vector.load %arg2[%c0_2, %c0_3, %c0_4] : memref<4x16x8xbf16, #tpu.memory_space<vmem>>, vector<4x16x8xbf16>
    %2 = vector.shape_cast %1 : vector<4x16x8xbf16> to vector<64x8xbf16>
    "tpu.trace_start"() <{level = 10 : i32, message = "gij,gjf->gif"}> : () -> ()
    %cst = arith.constant dense<0.000000e+00> : vector<4x16x8xf32>
    %3 = tpu.matmul %0, %1, %cst {dimension_numbers = #tpu.dot_dimension_numbers<[2], [1], [1], [2], [0, 0, 0, 1, 1, 2], [0], [0]>} : vector<4x16x16xbf16>, vector<4x16x8xbf16>, vector<4x16x8xf32> -> vector<4x16x8xf32>
    "tpu.trace_stop"() : () -> ()
    %4 = vector.shape_cast %3 : vector<4x16x8xf32> to vector<64x8xf32>
    %5 = arith.truncf %4 : vector<64x8xf32> to vector<64x8xbf16>
    %c0_5 = arith.constant 0 : index
    %c0_6 = arith.constant 0 : index
    %6 = vector.load %arg3[%c0_5, %c0_6] : memref<8x64xbf16, #tpu.memory_space<vmem>>, vector<8x64xbf16>
    %cst_7 = arith.constant dense<0.000000e+00> : vector<64x64xf32>
    %7 = tpu.matmul %5, %6, %cst_7 {dimension_numbers = #tpu.dot_dimension_numbers<[1], [0], [0], [1], [0, 0, 1, 1], [], []>} : vector<64x8xbf16>, vector<8x64xbf16>, vector<64x64xf32> -> vector<64x64xf32>
    %c0_8 = arith.constant 0 : index
    %c0_9 = arith.constant 0 : index
    %8 = vector.load %arg4[%c0_8, %c0_9] : memref<8x64xbf16, #tpu.memory_space<vmem>>, vector<8x64xbf16>
    %cst_10 = arith.constant dense<0.000000e+00> : vector<64x64xf32>
    %9 = tpu.matmul %2, %8, %cst_10 {dimension_numbers = #tpu.dot_dimension_numbers<[1], [0], [0], [1], [0, 0, 1, 1], [], []>} : vector<64x8xbf16>, vector<8x64xbf16>, vector<64x64xf32> -> vector<64x64xf32>
    %10 = arith.addf %7, %9 : vector<64x64xf32>
    %c0_11 = arith.constant 0 : index
    %c0_12 = arith.constant 0 : index
    %11 = vector.load %arg7[%c0_11, %c0_12] : memref<1x64xf32, #tpu.memory_space<vmem>>, vector<1x64xf32>
    %12 = vector.broadcast %11 : vector<1x64xf32> to vector<64x64xf32>
    %13 = arith.addf %10, %12 : vector<64x64xf32>
    %cst_13 = arith.constant 0.000000e+00 : f32
    %14 = vector.broadcast %cst_13 : f32 to vector<64x64xf32>
    %15 = arith.maximumf %13, %14 : vector<64x64xf32>
    %16 = arith.truncf %15 : vector<64x64xf32> to vector<64x64xbf16>
    %17 = vector.shape_cast %16 : vector<64x64xbf16> to vector<4x16x64xbf16>
    "tpu.trace_start"() <{level = 10 : i32, message = "gij,gjf->gif"}> : () -> ()
    %cst_14 = arith.constant dense<0.000000e+00> : vector<4x16x64xf32>
    %18 = tpu.matmul %0, %17, %cst_14 {dimension_numbers = #tpu.dot_dimension_numbers<[2], [1], [1], [2], [0, 0, 0, 1, 1, 2], [0], [0]>} : vector<4x16x16xbf16>, vector<4x16x64xbf16>, vector<4x16x64xf32> -> vector<4x16x64xf32>
    "tpu.trace_stop"() : () -> ()
    %19 = vector.shape_cast %18 : vector<4x16x64xf32> to vector<64x64xf32>
    %20 = arith.truncf %19 : vector<64x64xf32> to vector<64x64xbf16>
    %c0_15 = arith.constant 0 : index
    %c0_16 = arith.constant 0 : index
    %21 = vector.load %arg5[%c0_15, %c0_16] : memref<64x64xbf16, #tpu.memory_space<vmem>>, vector<64x64xbf16>
    %cst_17 = arith.constant dense<0.000000e+00> : vector<64x64xf32>
    %22 = tpu.matmul %20, %21, %cst_17 {dimension_numbers = #tpu.dot_dimension_numbers<[1], [0], [0], [1], [0, 0, 1, 1], [], []>} : vector<64x64xbf16>, vector<64x64xbf16>, vector<64x64xf32> -> vector<64x64xf32>
    %c0_18 = arith.constant 0 : index
    %c0_19 = arith.constant 0 : index
    %23 = vector.load %arg6[%c0_18, %c0_19] : memref<64x64xbf16, #tpu.memory_space<vmem>>, vector<64x64xbf16>
    %cst_20 = arith.constant dense<0.000000e+00> : vector<64x64xf32>
    %24 = tpu.matmul %16, %23, %cst_20 {dimension_numbers = #tpu.dot_dimension_numbers<[1], [0], [0], [1], [0, 0, 1, 1], [], []>} : vector<64x64xbf16>, vector<64x64xbf16>, vector<64x64xf32> -> vector<64x64xf32>
    %25 = arith.addf %22, %24 : vector<64x64xf32>
    %c0_21 = arith.constant 0 : index
    %c0_22 = arith.constant 0 : index
    %26 = vector.load %arg8[%c0_21, %c0_22] : memref<1x64xf32, #tpu.memory_space<vmem>>, vector<1x64xf32>
    %27 = vector.broadcast %26 : vector<1x64xf32> to vector<64x64xf32>
    %28 = arith.addf %25, %27 : vector<64x64xf32>
    %cst_23 = arith.constant 0.000000e+00 : f32
    %29 = vector.broadcast %cst_23 : f32 to vector<64x64xf32>
    %30 = arith.maximumf %28, %29 : vector<64x64xf32>
    %31 = arith.truncf %30 : vector<64x64xf32> to vector<64x64xbf16>
    %c0_24 = arith.constant 0 : index
    %c0_25 = arith.constant 0 : index
    %32 = vector.load %arg9[%c0_24, %c0_25] : memref<64x128xbf16, #tpu.memory_space<vmem>>, vector<64x128xbf16>
    %cst_26 = arith.constant dense<0.000000e+00> : vector<64x128xf32>
    %33 = tpu.matmul %31, %32, %cst_26 {dimension_numbers = #tpu.dot_dimension_numbers<[1], [0], [0], [1], [0, 0, 1, 1], [], []>} : vector<64x64xbf16>, vector<64x128xbf16>, vector<64x128xf32> -> vector<64x128xf32>
    %c0_27 = arith.constant 0 : index
    %c0_28 = arith.constant 0 : index
    %34 = vector.load %arg10[%c0_27, %c0_28] : memref<1x128xf32, #tpu.memory_space<vmem>>, vector<1x128xf32>
    %35 = vector.broadcast %34 : vector<1x128xf32> to vector<64x128xf32>
    %36 = arith.addf %33, %35 : vector<64x128xf32>
    %c0_29 = arith.constant 0 : index
    %c0_30 = arith.constant 0 : index
    %37 = vector.load %arg11[%c0_29, %c0_30] : memref<64x128xf32, #tpu.memory_space<vmem>>, vector<64x128xf32>
    tpu.vector_store %arg11[%c0_29, %c0_30], %36 {strides = array<i32>} : memref<64x128xf32, #tpu.memory_space<vmem>>, vector<64x128xf32>,
    return
  }
  func.func @transform_0(%arg0: i32) -> (i32, i32, i32) {
    %c0_i32 = arith.constant 0 : i32
    %c0_i32_0 = arith.constant 0 : i32
    %c0_i32_1 = arith.constant 0 : i32
    return %arg0, %c0_i32, %c0_i32_0 : i32, i32, i32
  }
  func.func @transform_1(%arg0: i32) -> (i32, i32, i32) {
    %c0_i32 = arith.constant 0 : i32
    %c0_i32_0 = arith.constant 0 : i32
    %c0_i32_1 = arith.constant 0 : i32
    return %arg0, %c0_i32, %c0_i32_0 : i32, i32, i32
  }
  func.func @transform_2(%arg0: i32) -> (i32, i32) {
    %c0_i32 = arith.constant 0 : i32
    %c0_i32_0 = arith.constant 0 : i32
    %c0_i32_1 = arith.constant 0 : i32
    return %c0_i32, %c0_i32_0 : i32, i32
  }
  func.func @transform_3(%arg0: i32) -> (i32, i32) {
    %c0_i32 = arith.constant 0 : i32
    %c0_i32_0 = arith.constant 0 : i32
    %c0_i32_1 = arith.constant 0 : i32
    return %c0_i32, %c0_i32_0 : i32, i32
  }
  func.func @transform_4(%arg0: i32) -> (i32, i32) {
    %c0_i32 = arith.constant 0 : i32
    %c0_i32_0 = arith.constant 0 : i32
    %c0_i32_1 = arith.constant 0 : i32
    return %c0_i32, %c0_i32_0 : i32, i32
  }
  func.func @transform_5(%arg0: i32) -> (i32, i32) {
    %c0_i32 = arith.constant 0 : i32
    %c0_i32_0 = arith.constant 0 : i32
    %c0_i32_1 = arith.constant 0 : i32
    return %c0_i32, %c0_i32_0 : i32, i32
  }
  func.func @transform_6(%arg0: i32) -> (i32, i32) {
    %c0_i32 = arith.constant 0 : i32
    %c0_i32_0 = arith.constant 0 : i32
    %c0_i32_1 = arith.constant 0 : i32
    return %c0_i32, %c0_i32_0 : i32, i32
  }
  func.func @transform_7(%arg0: i32) -> (i32, i32) {
    %c0_i32 = arith.constant 0 : i32
    %c0_i32_0 = arith.constant 0 : i32
    %c0_i32_1 = arith.constant 0 : i32
    return %c0_i32, %c0_i32_0 : i32, i32
  }
  func.func @transform_8(%arg0: i32) -> (i32, i32) {
    %c0_i32 = arith.constant 0 : i32
    %c0_i32_0 = arith.constant 0 : i32
    %c0_i32_1 = arith.constant 0 : i32
    return %c0_i32, %c0_i32_0 : i32, i32
  }
  func.func @transform_9(%arg0: i32) -> (i32, i32) {
    %c0_i32 = arith.constant 0 : i32
    %c0_i32_0 = arith.constant 0 : i32
    %c0_i32_1 = arith.constant 0 : i32
    return %c0_i32, %c0_i32_0 : i32, i32
  }
  func.func @transform_10(%arg0: i32) -> (i32, i32) {
    %c0_i32 = arith.constant 0 : i32
    %c0_i32_0 = arith.constant 0 : i32
    return %arg0, %c0_i32 : i32, i32
  }
}

</mosaic_0001>

<llo_original>
// kernel: tpu_custom_call.1
$region0: #{tpu_custom_call.1}
  #allocation0 [shape = 'u32[]', space=smem, size = 0x4, offset = 0x4, fixed_abs, tag = 'smem constant byte address 0x4 - core index']
  #allocation1 [shape = 'u32[144,128]{1,0:T(1,128)}', space=vmem, size = 0x12000, scoped, tag = 'internal scratch']
  %s0 = inlined_call_operand.vmem [shape: bf16[4,16,16], index: 0, kind: input, shape index: {}]
  %s1 = inlined_call_operand.vmem [shape: bf16[4,16,8], index: 1, kind: input, shape index: {}]
  %s2 = inlined_call_operand.hbm [shape: bf16[8,64], index: 2, kind: input, shape index: {}]
  %s3 = inlined_call_operand.hbm [shape: bf16[8,64], index: 3, kind: input, shape index: {}]
  %s4 = inlined_call_operand.hbm [shape: bf16[64,64], index: 4, kind: input, shape index: {}]
  %s5 = inlined_call_operand.vmem [shape: bf16[64,64], index: 5, kind: input, shape index: {}]
  %s6 = inlined_call_operand.vmem [shape: f32[1,64], index: 6, kind: input, shape index: {}]
  %s7 = inlined_call_operand.vmem [shape: f32[1,64], index: 7, kind: input, shape index: {}]
  %s8 = inlined_call_operand.hbm [shape: bf16[64,128], index: 8, kind: input, shape index: {}]
  %s9 = inlined_call_operand.vmem [shape: f32[1,128], index: 9, kind: input, shape index: {}]
  %s10 = inlined_call_operand.hbm [shape: f32[64,128], index: 10, kind: output, shape index: {}]
  %s11 = sld [smem:[#allocation0]]
  $region66: #{tpu_custom_call.1} parent=0
    _
  %s13 = ssub.s32 1, %s11
  %s14 = scalar_select 0, %s13, %s11
  $region1: #{tpu_custom_call.1} parent=0
    #allocation2 [shape = 'u8[2048]{0}', space=vmem, size = 0x800, scoped, tag = 'input window, operand 2, single buffered']
    #allocation3 [shape = 's32[1]{0}', space=sflag, size = 0x4, scoped, tag = 'scoped memory for tpu_custom_call.1']
    #allocation4 [shape = 's32[1]{0}', space=sflag, size = 0x4, scoped, tag = 'scoped memory for tpu_custom_call.1']
    #allocation5 [shape = 'u8[2048]{0}', space=vmem, size = 0x800, scoped, tag = 'input window, operand 3, single buffered']
    #allocation6 [shape = 's32[1]{0}', space=sflag, size = 0x4, scoped, tag = 'scoped memory for tpu_custom_call.1']
    #allocation7 [shape = 'u8[16384]{0}', space=vmem, size = 0x4000, scoped, tag = 'input window, operand 4, single buffered']
    #allocation8 [shape = 'u8[16384]{0}', space=vmem, size = 0x4000, scoped, tag = 'input window, operand 8, single buffered']
    #allocation9 [shape = 's32[1]{0}', space=sflag, size = 0x4, scoped, tag = 'scoped memory for tpu_custom_call.1']
    #allocation10 [shape = 'u8[32768]{0}', space=vmem, size = 0x8000, scoped, tag = 'output window, operand 0, single buffered']
    %15 = vsyncpa [#allocation3], 0
    %16 = vsyncpa [#allocation6], 0
    %17 = vsyncpa [#allocation9], 0
    %18 = vsyncpa [#allocation4], 0
    // Predicated region
    $region2: #{tpu_custom_call.1} parent=1 // pred_check
      _
    $region3: #{tpu_custom_call.1} parent=1 // pred_check_branch
      %20 = sbr.rel (0) target = $region5
    $region4: #{tpu_custom_call.1} parent=1 // pred_region
      _
    $region5: #{tpu_custom_call.1} parent=1 // pred_fallthru
      _
    // Predicated region
    $region6: #{tpu_custom_call.1} parent=1 // pred_check
      _
    $region7: #{tpu_custom_call.1} parent=1 // pred_check_branch
      %22 = sbr.rel (0) target = $region9
    $region8: #{tpu_custom_call.1} parent=1 // pred_region
      _
    $region9: #{tpu_custom_call.1} parent=1 // pred_fallthru
      _
    // Predicated region
    $region10: #{tpu_custom_call.1} parent=1 // pred_check
      _
    $region11: #{tpu_custom_call.1} parent=1 // pred_check_branch
      %24 = sbr.rel (0) target = $region13
    $region12: #{tpu_custom_call.1} parent=1 // pred_region
      %s26 = ssub.s32 64, 64
      %27 = vsyncadd [#allocation3], %s26
      %s29 = sshll.u32 [#allocation2], 4
      %s30 = int_to_ptr.vmem [resolvable:$true] %s29
      %32 = dma.hbm_to_vmem [thread:$0]  %s2, 64, %s30, [#allocation3]
    $region13: #{tpu_custom_call.1} parent=1 // pred_fallthru
      _
    // Predicated region
    $region14: #{tpu_custom_call.1} parent=1 // pred_check
      _
    $region15: #{tpu_custom_call.1} parent=1 // pred_check_branch
      %34 = sbr.rel (0) target = $region17
    $region16: #{tpu_custom_call.1} parent=1 // pred_region
      %s36 = ssub.s32 64, 64
      %37 = vsyncadd [#allocation6], %s36
      %s39 = sshll.u32 [#allocation5], 4
      %s40 = int_to_ptr.vmem [resolvable:$true] %s39
      %42 = dma.hbm_to_vmem [thread:$0]  %s3, 64, %s40, [#allocation6]
    $region17: #{tpu_custom_call.1} parent=1 // pred_fallthru
      _
    // Predicated region
    $region18: #{tpu_custom_call.1} parent=1 // pred_check
      _
    $region19: #{tpu_custom_call.1} parent=1 // pred_check_branch
      %44 = sbr.rel (0) target = $region21
    $region20: #{tpu_custom_call.1} parent=1 // pred_region
      %s46 = ssub.s32 512, 512
      %47 = vsyncadd [#allocation6], %s46
      %s48 = sshll.u32 [#allocation7], 4
      %s49 = int_to_ptr.vmem [resolvable:$true] %s48
      %54 = dma.hbm_to_vmem [thread:$0]  %s4, 512, %s49, [#allocation6], 64, 64, 4
    $region21: #{tpu_custom_call.1} parent=1 // pred_fallthru
      _
    // Predicated region
    $region22: #{tpu_custom_call.1} parent=1 // pred_check
      _
    $region23: #{tpu_custom_call.1} parent=1 // pred_check_branch
      %56 = sbr.rel (0) target = $region25
    $region24: #{tpu_custom_call.1} parent=1 // pred_region
      _
    $region25: #{tpu_custom_call.1} parent=1 // pred_fallthru
      _
    // Predicated region
    $region26: #{tpu_custom_call.1} parent=1 // pred_check
      _
    $region27: #{tpu_custom_call.1} parent=1 // pred_check_branch
      %58 = sbr.rel (0) target = $region29
    $region28: #{tpu_custom_call.1} parent=1 // pred_region
      _
    $region29: #{tpu_custom_call.1} parent=1 // pred_fallthru
      _
    // Predicated region
    $region30: #{tpu_custom_call.1} parent=1 // pred_check
      _
    $region31: #{tpu_custom_call.1} parent=1 // pred_check_branch
      %60 = sbr.rel (0) target = $region33
    $region32: #{tpu_custom_call.1} parent=1 // pred_region
      _
    $region33: #{tpu_custom_call.1} parent=1 // pred_fallthru
      _
    // Predicated region
    $region34: #{tpu_custom_call.1} parent=1 // pred_check
      _
    $region35: #{tpu_custom_call.1} parent=1 // pred_check_branch
      %62 = sbr.rel (0) target = $region37
    $region36: #{tpu_custom_call.1} parent=1 // pred_region
      %s64 = ssub.s32 512, 512
      %65 = vsyncadd [#allocation9], %s64
      %s66 = sshll.u32 [#allocation8], 4
      %s67 = int_to_ptr.vmem [resolvable:$true] %s66
      %72 = dma.hbm_to_vmem [thread:$0]  %s8, 512, %s67, [#allocation9], 64, 64, 4
    $region37: #{tpu_custom_call.1} parent=1 // pred_fallthru
      _
    // Predicated region
    $region38: #{tpu_custom_call.1} parent=1 // pred_check
      _
    $region39: #{tpu_custom_call.1} parent=1 // pred_check_branch
      %74 = sbr.rel (0) target = $region41
    $region40: #{tpu_custom_call.1} parent=1 // pred_region
      _
    $region41: #{tpu_custom_call.1} parent=1 // pred_fallthru
      _
    // Predicated region
    $region42: #{tpu_custom_call.1} parent=1 // pred_check
      _
    $region43: #{tpu_custom_call.1} parent=1 // pred_check_branch
      %76 = sbr.rel (0) target = $region45
    $region44: #{tpu_custom_call.1} parent=1 // pred_region
      %77 = dma.done [#allocation3], 64
    $region45: #{tpu_custom_call.1} parent=1 // pred_fallthru
      _
    // Predicated region
    $region46: #{tpu_custom_call.1} parent=1 // pred_check
      _
    $region47: #{tpu_custom_call.1} parent=1 // pred_check_branch
      %79 = sbr.rel (0) target = $region49
    $region48: #{tpu_custom_call.1} parent=1 // pred_region
      %80 = dma.done [#allocation6], 64
    $region49: #{tpu_custom_call.1} parent=1 // pred_fallthru
      _
    // Predicated region
    $region50: #{tpu_custom_call.1} parent=1 // pred_check
      _
    $region51: #{tpu_custom_call.1} parent=1 // pred_check_branch
      %82 = sbr.rel (0) target = $region53
    $region52: #{tpu_custom_call.1} parent=1 // pred_region
      %83 = dma.done [#allocation6], 512
    $region53: #{tpu_custom_call.1} parent=1 // pred_fallthru
      _
    // Predicated region
    $region54: #{tpu_custom_call.1} parent=1 // pred_check
      _
    $region55: #{tpu_custom_call.1} parent=1 // pred_check_branch
      %85 = sbr.rel (0) target = $region57
    $region56: #{tpu_custom_call.1} parent=1 // pred_region
      %86 = dma.done [#allocation9], 512
    $region57: #{tpu_custom_call.1} parent=1 // pred_fallthru
      _
    %v88 = vld [vmem:[%s0] sm:$0xf]
    %v89 = vld [vmem:[%s0 + $0x4] sm:$0xf]
    %v90 = vld [vmem:[%s0 + $0x8] sm:$0xf]
    %v91 = vld [vmem:[%s0 + $0xc] sm:$0xf]
    %v92 = vld [vmem:[%s0 + $0x10] sm:$0xf]
    %v93 = vld [vmem:[%s0 + $0x14] sm:$0xf]
    %v94 = vld [vmem:[%s0 + $0x18] sm:$0xf]
    %v95 = vld [vmem:[%s0 + $0x1c] sm:$0xf]
    %v96 = vld [vmem:[%s1] sm:$0xf]
    %v97 = vld [vmem:[%s1 + $0x4] sm:$0xf]
    %v98 = vld [vmem:[%s1 + $0x8] sm:$0xf]
    %v99 = vld [vmem:[%s1 + $0xc] sm:$0xf]
    %v100 = vld [vmem:[%s1 + $0x10] sm:$0xf]
    %v101 = vld [vmem:[%s1 + $0x14] sm:$0xf]
    %v102 = vld [vmem:[%s1 + $0x18] sm:$0xf]
    %v103 = vld [vmem:[%s1 + $0x1c] sm:$0xf]
    %v106 = vunpack.c.l.b16 %v88
    %v107 = vunpack.c.l.b16 %v89
    %v108 = vpack.c.b16 %v107, %v106
    %v111 = vunpack.c.l.b16 %v96
    %v112 = vunpack.c.l.b16 %v97
    %v113 = vpack.c.b16 %v112, %v111
    %vm115 = vcmask 130048
    %v117 = vsel %vm115, %v108, 0
    %119 = vmatprep.subr.bf16.mxu0 0
    %120 = vmatpush1.bf16.msra.mxu0 %v113
    %121 = vmatprep.subr.bf16.mxu0 0
    %122 = vmatpush1.bf16.msra.mxu0 0
    %123 = vmatprep.subr.bf16.mxu0 0
    %124 = vmatpush1.bf16.msra.mxu0 0
    %125 = vmatprep.subr.bf16.mxu0 0
    %126 = vmatpush1.bf16.msra.mxu0 0
    %127 = vmatprep.subr.bf16.mxu0 0
    %128 = vmatpush1.bf16.msra.mxu0 0
    %129 = vmatprep.subr.bf16.mxu0 0
    %130 = vmatpush1.bf16.msra.mxu0 0
    %131 = vmatprep.subr.bf16.mxu0 0
    %132 = vmatpush1.bf16.msra.mxu0 0
    %133 = vmatprep.subr.bf16.mxu0 0
    %134 = vmatpush1.bf16.msra.mxu0 0
    %135 = vmatprep.subr.bf16.mxu0 0
    %136 = vmatpush1.bf16.msra.mxu0 0
    %137 = vmatprep.subr.bf16.mxu0 0
    %138 = vmatpush1.bf16.msra.mxu0 0
    %139 = vmatprep.subr.bf16.mxu0 0
    %140 = vmatpush1.bf16.msra.mxu0 0
    %141 = vmatprep.subr.bf16.mxu0 0
    %142 = vmatpush1.bf16.msra.mxu0 0
    %143 = vmatprep.subr.bf16.mxu0 0
    %144 = vmatpush1.bf16.msra.mxu0 0
    %145 = vmatprep.subr.bf16.mxu0 0
    %146 = vmatpush1.bf16.msra.mxu0 0
    %147 = vmatprep.subr.bf16.mxu0 0
    %148 = vmatpush1.bf16.msra.mxu0 0
    %149 = vmatprep.subr.bf16.mxu0 0
    %150 = vmatpush1.bf16.msra.mxu0 0
    %151 = vmatprep.mubr.bf16.mxu0 0
    %152 = vmatmul.mubr.bf16.gmra.mrb[0].mxu0 %v117
    %v153 = vpop.f32.mrb[0].mxu0
    %v154 = vadd.f32 0.0, %v153
    %v155 = vpop.f32.mrb[0].mxu0
    %v156 = vpop.f32.mrb[0].mxu0
    %v157 = vadd.f32 0.0, %v156
    %v158 = vpop.f32.mrb[0].mxu0
    %159 = vdwg.mxu0
    %v162 = vunpack.c.l.b16 %v90
    %v163 = vunpack.c.l.b16 %v91
    %v164 = vpack.c.b16 %v163, %v162
    %v167 = vunpack.c.l.b16 %v98
    %v168 = vunpack.c.l.b16 %v99
    %v169 = vpack.c.b16 %v168, %v167
    %v172 = vsel %vm115, %v164, 0
    %174 = vmatprep.subr.bf16.mxu0 0
    %175 = vmatpush1.bf16.msra.mxu0 %v169
    %176 = vmatprep.subr.bf16.mxu0 0
    %177 = vmatpush1.bf16.msra.mxu0 0
    %178 = vmatprep.subr.bf16.mxu0 0
    %179 = vmatpush1.bf16.msra.mxu0 0
    %180 = vmatprep.subr.bf16.mxu0 0
    %181 = vmatpush1.bf16.msra.mxu0 0
    %182 = vmatprep.subr.bf16.mxu0 0
    %183 = vmatpush1.bf16.msra.mxu0 0
    %184 = vmatprep.subr.bf16.mxu0 0
    %185 = vmatpush1.bf16.msra.mxu0 0
    %186 = vmatprep.subr.bf16.mxu0 0
    %187 = vmatpush1.bf16.msra.mxu0 0
    %188 = vmatprep.subr.bf16.mxu0 0
    %189 = vmatpush1.bf16.msra.mxu0 0
    %190 = vmatprep.subr.bf16.mxu0 0
    %191 = vmatpush1.bf16.msra.mxu0 0
    %192 = vmatprep.subr.bf16.mxu0 0
    %193 = vmatpush1.bf16.msra.mxu0 0
    %194 = vmatprep.subr.bf16.mxu0 0
    %195 = vmatpush1.bf16.msra.mxu0 0
    %196 = vmatprep.subr.bf16.mxu0 0
    %197 = vmatpush1.bf16.msra.mxu0 0
    %198 = vmatprep.subr.bf16.mxu0 0
    %199 = vmatpush1.bf16.msra.mxu0 0
    %200 = vmatprep.subr.bf16.mxu0 0
    %201 = vmatpush1.bf16.msra.mxu0 0
    %202 = vmatprep.subr.bf16.mxu0 0
    %203 = vmatpush1.bf16.msra.mxu0 0
    %204 = vmatprep.subr.bf16.mxu0 0
    %205 = vmatpush1.bf16.msra.mxu0 0
    %206 = vmatprep.mubr.bf16.mxu0 0
    %207 = vmatmul.mubr.bf16.gmra.mrb[0].mxu0 %v172
    %v208 = vpop.f32.mrb[0].mxu0
    %v209 = vadd.f32 0.0, %v208
    %v210 = vpop.f32.mrb[0].mxu0
    %v211 = vpop.f32.mrb[0].mxu0
    %v212 = vadd.f32 0.0, %v211
    %v213 = vpop.f32.mrb[0].mxu0
    %214 = vdwg.mxu0
    %v217 = vunpack.c.l.b16 %v92
    %v218 = vunpack.c.l.b16 %v93
    %v219 = vpack.c.b16 %v218, %v217
    %v222 = vunpack.c.l.b16 %v100
    %v223 = vunpack.c.l.b16 %v101
    %v224 = vpack.c.b16 %v223, %v222
    %v227 = vsel %vm115, %v219, 0
    %229 = vmatprep.subr.bf16.mxu0 0
    %230 = vmatpush1.bf16.msra.mxu0 %v224
    %231 = vmatprep.subr.bf16.mxu0 0
    %232 = vmatpush1.bf16.msra.mxu0 0
    %233 = vmatprep.subr.bf16.mxu0 0
    %234 = vmatpush1.bf16.msra.mxu0 0
    %235 = vmatprep.subr.bf16.mxu0 0
    %236 = vmatpush1.bf16.msra.mxu0 0
    %237 = vmatprep.subr.bf16.mxu0 0
    %238 = vmatpush1.bf16.msra.mxu0 0
    %239 = vmatprep.subr.bf16.mxu0 0
    %240 = vmatpush1.bf16.msra.mxu0 0
    %241 = vmatprep.subr.bf16.mxu0 0
    %242 = vmatpush1.bf16.msra.mxu0 0
    %243 = vmatprep.subr.bf16.mxu0 0
    %244 = vmatpush1.bf16.msra.mxu0 0
    %245 = vmatprep.subr.bf16.mxu0 0
    %246 = vmatpush1.bf16.msra.mxu0 0
    %247 = vmatprep.subr.bf16.mxu0 0
    %248 = vmatpush1.bf16.msra.mxu0 0
    %249 = vmatprep.subr.bf16.mxu0 0
    %250 = vmatpush1.bf16.msra.mxu0 0
    %251 = vmatprep.subr.bf16.mxu0 0
    %252 = vmatpush1.bf16.msra.mxu0 0
    %253 = vmatprep.subr.bf16.mxu0 0
    %254 = vmatpush1.bf16.msra.mxu0 0
    %255 = vmatprep.subr.bf16.mxu0 0
    %256 = vmatpush1.bf16.msra.mxu0 0
    %257 = vmatprep.subr.bf16.mxu0 0
    %258 = vmatpush1.bf16.msra.mxu0 0
    %259 = vmatprep.subr.bf16.mxu0 0
    %260 = vmatpush1.bf16.msra.mxu0 0
    %261 = vmatprep.mubr.bf16.mxu0 0
    %262 = vmatmul.mubr.bf16.gmra.mrb[0].mxu0 %v227
    %v263 = vpop.f32.mrb[0].mxu0
    %v264 = vadd.f32 0.0, %v263
    %v265 = vpop.f32.mrb[0].mxu0
    %v266 = vpop.f32.mrb[0].mxu0
    %v267 = vadd.f32 0.0, %v266
    %v268 = vpop.f32.mrb[0].mxu0
    %269 = vdwg.mxu0
    %v272 = vunpack.c.l.b16 %v94
    %v273 = vunpack.c.l.b16 %v95
    %v274 = vpack.c.b16 %v273, %v272
    %v277 = vunpack.c.l.b16 %v102
    %v278 = vunpack.c.l.b16 %v103
    %v279 = vpack.c.b16 %v278, %v277
    %v282 = vsel %vm115, %v274, 0
    %284 = vmatprep.subr.bf16.mxu0 0
    %285 = vmatpush1.bf16.msra.mxu0 %v279
    %286 = vmatprep.subr.bf16.mxu0 0
    %287 = vmatpush1.bf16.msra.mxu0 0
    %288 = vmatprep.subr.bf16.mxu0 0
    %289 = vmatpush1.bf16.msra.mxu0 0
    %290 = vmatprep.subr.bf16.mxu0 0
    %291 = vmatpush1.bf16.msra.mxu0 0
    %292 = vmatprep.subr.bf16.mxu0 0
    %293 = vmatpush1.bf16.msra.mxu0 0
    %294 = vmatprep.subr.bf16.mxu0 0
    %295 = vmatpush1.bf16.msra.mxu0 0
    %296 = vmatprep.subr.bf16.mxu0 0
    %297 = vmatpush1.bf16.msra.mxu0 0
    %298 = vmatprep.subr.bf16.mxu0 0
    %299 = vmatpush1.bf16.msra.mxu0 0
    %300 = vmatprep.subr.bf16.mxu0 0
    %301 = vmatpush1.bf16.msra.mxu0 0
    %302 = vmatprep.subr.bf16.mxu0 0
    %303 = vmatpush1.bf16.msra.mxu0 0
    %304 = vmatprep.subr.bf16.mxu0 0
    %305 = vmatpush1.bf16.msra.mxu0 0
    %306 = vmatprep.subr.bf16.mxu0 0
    %307 = vmatpush1.bf16.msra.mxu0 0
    %308 = vmatprep.subr.bf16.mxu0 0
    %309 = vmatpush1.bf16.msra.mxu0 0
    %310 = vmatprep.subr.bf16.mxu0 0
    %311 = vmatpush1.bf16.msra.mxu0 0
    %312 = vmatprep.subr.bf16.mxu0 0
    %313 = vmatpush1.bf16.msra.mxu0 0
    %314 = vmatprep.subr.bf16.mxu0 0
    %315 = vmatpush1.bf16.msra.mxu0 0
    %316 = vmatprep.mubr.bf16.mxu0 0
    %317 = vmatmul.mubr.bf16.gmra.mrb[0].mxu0 %v282
    %v318 = vpop.f32.mrb[0].mxu0
    %v319 = vadd.f32 0.0, %v318
    %v320 = vpop.f32.mrb[0].mxu0
    %v321 = vpop.f32.mrb[0].mxu0
    %v322 = vadd.f32 0.0, %v321
    %v323 = vpop.f32.mrb[0].mxu0
    %324 = vdwg.mxu0
    %v325 = vpack.c.bf16 %v157, %v154
    %v326 = vpack.c.bf16 %v212, %v209
    %v327 = vpack.c.bf16 %v267, %v264
    %v328 = vpack.c.bf16 %v322, %v319
    %v329 = vld [vmem:[#allocation2] sm:$0xf]
    %v330 = vld [vmem:[#allocation5] sm:$0xf]
    %vm331 = vcmask 64512
    %v333 = vsel %vm331, %v113, 0
    %v336 = vsel %vm331, %v169, 0
    %v339 = vsel %vm331, %v224, 0
    %v342 = vsel %vm331, %v279, 0
    %vm344 = vcmask 1043456
    %v346 = vsel %vm344, %v330, 0
    %348 = vmatprep.subr.bf16.mxu0 0
    %349 = vmatpush1.bf16.msra.mxu0 %v346
    %350 = vmatprep.subr.bf16.mxu0 0
    %351 = vmatpush1.bf16.msra.mxu0 0
    %352 = vmatprep.subr.bf16.mxu0 0
    %353 = vmatpush1.bf16.msra.mxu0 0
    %354 = vmatprep.subr.bf16.mxu0 0
    %355 = vmatpush1.bf16.msra.mxu0 0
    %356 = vmatprep.subr.bf16.mxu0 0
    %357 = vmatpush1.bf16.msra.mxu0 0
    %358 = vmatprep.subr.bf16.mxu0 0
    %359 = vmatpush1.bf16.msra.mxu0 0
    %360 = vmatprep.subr.bf16.mxu0 0
    %361 = vmatpush1.bf16.msra.mxu0 0
    %362 = vmatprep.subr.bf16.mxu0 0
    %363 = vmatpush1.bf16.msra.mxu0 0
    %364 = vmatprep.subr.bf16.mxu0 0
    %365 = vmatpush1.bf16.msra.mxu0 0
    %366 = vmatprep.subr.bf16.mxu0 0
    %367 = vmatpush1.bf16.msra.mxu0 0
    %368 = vmatprep.subr.bf16.mxu0 0
    %369 = vmatpush1.bf16.msra.mxu0 0
    %370 = vmatprep.subr.bf16.mxu0 0
    %371 = vmatpush1.bf16.msra.mxu0 0
    %372 = vmatprep.subr.bf16.mxu0 0
    %373 = vmatpush1.bf16.msra.mxu0 0
    %374 = vmatprep.subr.bf16.mxu0 0
    %375 = vmatpush1.bf16.msra.mxu0 0
    %376 = vmatprep.subr.bf16.mxu0 0
    %377 = vmatpush1.bf16.msra.mxu0 0
    %378 = vmatprep.subr.bf16.mxu0 0
    %379 = vmatpush1.bf16.msra.mxu0 0
    %380 = vmatprep.mubr.bf16.mxu0 0
    %381 = vmatmul.mubr.bf16.gmra.mrb[0].mxu0 %v333
    %v382 = vpop.f32.mrb[0].mxu0
    %v383 = vadd.f32 0.0, %v382
    %v384 = vpop.f32.mrb[0].mxu0
    %v385 = vpop.f32.mrb[0].mxu0
    %v386 = vadd.f32 0.0, %v385
    %v387 = vpop.f32.mrb[0].mxu0
    %388 = vmatprep.mubr.bf16.mxu0 0
    %389 = vmatmul.mubr.bf16.gmra.mrb[0].mxu0 %v336
    %v390 = vpop.f32.mrb[0].mxu0
    %v391 = vadd.f32 0.0, %v390
    %v392 = vpop.f32.mrb[0].mxu0
    %v393 = vpop.f32.mrb[0].mxu0
    %v394 = vadd.f32 0.0, %v393
    %v395 = vpop.f32.mrb[0].mxu0
    %396 = vmatprep.mubr.bf16.mxu0 0
    %397 = vmatmul.mubr.bf16.gmra.mrb[0].mxu0 %v339
    %v398 = vpop.f32.mrb[0].mxu0
    %v399 = vadd.f32 0.0, %v398
    %v400 = vpop.f32.mrb[0].mxu0
    %v401 = vpop.f32.mrb[0].mxu0
    %v402 = vadd.f32 0.0, %v401
    %v403 = vpop.f32.mrb[0].mxu0
    %404 = vmatprep.mubr.bf16.mxu0 0
    %405 = vmatmul.mubr.bf16.gmra.mrb[0].mxu0 %v342
    %v406 = vpop.f32.mrb[0].mxu0
    %v407 = vadd.f32 0.0, %v406
    %v408 = vpop.f32.mrb[0].mxu0
    %v409 = vpop.f32.mrb[0].mxu0
    %v410 = vadd.f32 0.0, %v409
    %v411 = vpop.f32.mrb[0].mxu0
    %412 = vdwg.mxu0
    %v414 = vsel %vm331, %v325, 0
    %v417 = vsel %vm331, %v326, 0
    %v420 = vsel %vm331, %v327, 0
    %v423 = vsel %vm331, %v328, 0
    %v426 = vsel %vm344, %v329, 0
    %428 = vmatprep.subr.bf16.mxu0 0
    %429 = vmatpush1.bf16.msra.mxu0 %v426
    %430 = vmatprep.subr.bf16.mxu0 0
    %431 = vmatpush1.bf16.msra.mxu0 0
    %432 = vmatprep.subr.bf16.mxu0 0
    %433 = vmatpush1.bf16.msra.mxu0 0
    %434 = vmatprep.subr.bf16.mxu0 0
    %435 = vmatpush1.bf16.msra.mxu0 0
    %436 = vmatprep.subr.bf16.mxu0 0
    %437 = vmatpush1.bf16.msra.mxu0 0
    %438 = vmatprep.subr.bf16.mxu0 0
    %439 = vmatpush1.bf16.msra.mxu0 0
    %440 = vmatprep.subr.bf16.mxu0 0
    %441 = vmatpush1.bf16.msra.mxu0 0
    %442 = vmatprep.subr.bf16.mxu0 0
    %443 = vmatpush1.bf16.msra.mxu0 0
    %444 = vmatprep.subr.bf16.mxu0 0
    %445 = vmatpush1.bf16.msra.mxu0 0
    %446 = vmatprep.subr.bf16.mxu0 0
    %447 = vmatpush1.bf16.msra.mxu0 0
    %448 = vmatprep.subr.bf16.mxu0 0
    %449 = vmatpush1.bf16.msra.mxu0 0
    %450 = vmatprep.subr.bf16.mxu0 0
    %451 = vmatpush1.bf16.msra.mxu0 0
    %452 = vmatprep.subr.bf16.mxu0 0
    %453 = vmatpush1.bf16.msra.mxu0 0
    %454 = vmatprep.subr.bf16.mxu0 0
    %455 = vmatpush1.bf16.msra.mxu0 0
    %456 = vmatprep.subr.bf16.mxu0 0
    %457 = vmatpush1.bf16.msra.mxu0 0
    %458 = vmatprep.subr.bf16.mxu0 0
    %459 = vmatpush1.bf16.msra.mxu0 0
    %460 = vmatprep.mubr.bf16.mxu0 0
    %461 = vmatmul.mubr.bf16.gmra.mrb[0].mxu0 %v414
    %v462 = vpop.f32.mrb[0].mxu0
    %v463 = vadd.f32 %v383, %v462
    %v464 = vpop.f32.mrb[0].mxu0
    %v465 = vpop.f32.mrb[0].mxu0
    %v466 = vadd.f32 %v386, %v465
    %v467 = vpop.f32.mrb[0].mxu0
    %468 = vmatprep.mubr.bf16.mxu0 0
    %469 = vmatmul.mubr.bf16.gmra.mrb[0].mxu0 %v417
    %v470 = vpop.f32.mrb[0].mxu0
    %v471 = vadd.f32 %v391, %v470
    %v472 = vpop.f32.mrb[0].mxu0
    %v473 = vpop.f32.mrb[0].mxu0
    %v474 = vadd.f32 %v394, %v473
    %v475 = vpop.f32.mrb[0].mxu0
    %476 = vmatprep.mubr.bf16.mxu0 0
    %477 = vmatmul.mubr.bf16.gmra.mrb[0].mxu0 %v420
    %v478 = vpop.f32.mrb[0].mxu0
    %v479 = vadd.f32 %v399, %v478
    %v480 = vpop.f32.mrb[0].mxu0
    %v481 = vpop.f32.mrb[0].mxu0
    %v482 = vadd.f32 %v402, %v481
    %v483 = vpop.f32.mrb[0].mxu0
    %484 = vmatprep.mubr.bf16.mxu0 0
    %485 = vmatmul.mubr.bf16.gmra.mrb[0].mxu0 %v423
    %v486 = vpop.f32.mrb[0].mxu0
    %v487 = vadd.f32 %v407, %v486
    %v488 = vpop.f32.mrb[0].mxu0
    %v489 = vpop.f32.mrb[0].mxu0
    %v490 = vadd.f32 %v410, %v489
    %v491 = vpop.f32.mrb[0].mxu0
    %492 = vdwg.mxu0
    %v493 = vld [vmem:[%s6] sm:$0x1]
    %v495 = vlaneseq
    %v496 = vshrl.u32 %v495, 7
    %v497 = vsub.s32 0, %v496
    %v498 = vrot.slane %v493, %v497
    %v500 = vadd.f32 %v463, %v498
    %v501 = vadd.f32 %v466, %v498
    %v502 = vadd.f32 %v471, %v498
    %v503 = vadd.f32 %v474, %v498
    %v504 = vadd.f32 %v479, %v498
    %v505 = vadd.f32 %v482, %v498
    %v506 = vadd.f32 %v487, %v498
    %v507 = vadd.f32 %v490, %v498
    %v508 = vmax.f32 %v500, 0.0
    %v509 = vmax.f32 %v501, 0.0
    %v510 = vmax.f32 %v502, 0.0
    %v511 = vmax.f32 %v503, 0.0
    %v512 = vmax.f32 %v504, 0.0
    %v513 = vmax.f32 %v505, 0.0
    %v514 = vmax.f32 %v506, 0.0
    %v515 = vmax.f32 %v507, 0.0
    %v516 = vpack.c.bf16 %v509, %v508
    %v517 = vpack.c.bf16 %v511, %v510
    %v518 = vpack.c.bf16 %v513, %v512
    %v519 = vpack.c.bf16 %v515, %v514
    %520 = vmatprep.subr.bf16.mxu0 0
    %521 = vmatpush1.bf16.msra.mxu0 %v516
    %522 = vmatprep.subr.bf16.mxu0 0
    %523 = vmatpush1.bf16.msra.mxu0 0
    %524 = vmatprep.subr.bf16.mxu0 0
    %525 = vmatpush1.bf16.msra.mxu0 0
    %526 = vmatprep.subr.bf16.mxu0 0
    %527 = vmatpush1.bf16.msra.mxu0 0
    %528 = vmatprep.subr.bf16.mxu0 0
    %529 = vmatpush1.bf16.msra.mxu0 0
    %530 = vmatprep.subr.bf16.mxu0 0
    %531 = vmatpush1.bf16.msra.mxu0 0
    %532 = vmatprep.subr.bf16.mxu0 0
    %533 = vmatpush1.bf16.msra.mxu0 0
    %534 = vmatprep.subr.bf16.mxu0 0
    %535 = vmatpush1.bf16.msra.mxu0 0
    %536 = vmatprep.subr.bf16.mxu0 0
    %537 = vmatpush1.bf16.msra.mxu0 0
    %538 = vmatprep.subr.bf16.mxu0 0
    %539 = vmatpush1.bf16.msra.mxu0 0
    %540 = vmatprep.subr.bf16.mxu0 0
    %541 = vmatpush1.bf16.msra.mxu0 0
    %542 = vmatprep.subr.bf16.mxu0 0
    %543 = vmatpush1.bf16.msra.mxu0 0
    %544 = vmatprep.subr.bf16.mxu0 0
    %545 = vmatpush1.bf16.msra.mxu0 0
    %546 = vmatprep.subr.bf16.mxu0 0
    %547 = vmatpush1.bf16.msra.mxu0 0
    %548 = vmatprep.subr.bf16.mxu0 0
    %549 = vmatpush1.bf16.msra.mxu0 0
    %550 = vmatprep.subr.bf16.mxu0 0
    %551 = vmatpush1.bf16.msra.mxu0 0
    %552 = vmatprep.mubr.bf16.mxu0 0
    %553 = vmatmul.mubr.bf16.gmra.mrb[0].mxu0 %v117
    %v554 = vpop.f32.mrb[0].mxu0
    %v555 = vadd.f32 0.0, %v554
    %v556 = vpop.f32.mrb[0].mxu0
    %v557 = vpop.f32.mrb[0].mxu0
    %v558 = vadd.f32 0.0, %v557
    %v559 = vpop.f32.mrb[0].mxu0
    %560 = vdwg.mxu0
    %561 = vmatprep.subr.bf16.mxu0 0
    %562 = vmatpush1.bf16.msra.mxu0 %v517
    %563 = vmatprep.subr.bf16.mxu0 0
    %564 = vmatpush1.bf16.msra.mxu0 0
    %565 = vmatprep.subr.bf16.mxu0 0
    %566 = vmatpush1.bf16.msra.mxu0 0
    %567 = vmatprep.subr.bf16.mxu0 0
    %568 = vmatpush1.bf16.msra.mxu0 0
    %569 = vmatprep.subr.bf16.mxu0 0
    %570 = vmatpush1.bf16.msra.mxu0 0
    %571 = vmatprep.subr.bf16.mxu0 0
    %572 = vmatpush1.bf16.msra.mxu0 0
    %573 = vmatprep.subr.bf16.mxu0 0
    %574 = vmatpush1.bf16.msra.mxu0 0
    %575 = vmatprep.subr.bf16.mxu0 0
    %576 = vmatpush1.bf16.msra.mxu0 0
    %577 = vmatprep.subr.bf16.mxu0 0
    %578 = vmatpush1.bf16.msra.mxu0 0
    %579 = vmatprep.subr.bf16.mxu0 0
    %580 = vmatpush1.bf16.msra.mxu0 0
    %581 = vmatprep.subr.bf16.mxu0 0
    %582 = vmatpush1.bf16.msra.mxu0 0
    %583 = vmatprep.subr.bf16.mxu0 0
    %584 = vmatpush1.bf16.msra.mxu0 0
    %585 = vmatprep.subr.bf16.mxu0 0
    %586 = vmatpush1.bf16.msra.mxu0 0
    %587 = vmatprep.subr.bf16.mxu0 0
    %588 = vmatpush1.bf16.msra.mxu0 0
    %589 = vmatprep.subr.bf16.mxu0 0
    %590 = vmatpush1.bf16.msra.mxu0 0
    %591 = vmatprep.subr.bf16.mxu0 0
    %592 = vmatpush1.bf16.msra.mxu0 0
    %593 = vmatprep.mubr.bf16.mxu0 0
    %594 = vmatmul.mubr.bf16.gmra.mrb[0].mxu0 %v172
    %v595 = vpop.f32.mrb[0].mxu0
    %v596 = vadd.f32 0.0, %v595
    %v597 = vpop.f32.mrb[0].mxu0
    %v598 = vpop.f32.mrb[0].mxu0
    %v599 = vadd.f32 0.0, %v598
    %v600 = vpop.f32.mrb[0].mxu0
    %601 = vdwg.mxu0
    %602 = vmatprep.subr.bf16.mxu0 0
    %603 = vmatpush1.bf16.msra.mxu0 %v518
    %604 = vmatprep.subr.bf16.mxu0 0
    %605 = vmatpush1.bf16.msra.mxu0 0
    %606 = vmatprep.subr.bf16.mxu0 0
    %607 = vmatpush1.bf16.msra.mxu0 0
    %608 = vmatprep.subr.bf16.mxu0 0
    %609 = vmatpush1.bf16.msra.mxu0 0
    %610 = vmatprep.subr.bf16.mxu0 0
    %611 = vmatpush1.bf16.msra.mxu0 0
    %612 = vmatprep.subr.bf16.mxu0 0
    %613 = vmatpush1.bf16.msra.mxu0 0
    %614 = vmatprep.subr.bf16.mxu0 0
    %615 = vmatpush1.bf16.msra.mxu0 0
    %616 = vmatprep.subr.bf16.mxu0 0
    %617 = vmatpush1.bf16.msra.mxu0 0
    %618 = vmatprep.subr.bf16.mxu0 0
    %619 = vmatpush1.bf16.msra.mxu0 0
    %620 = vmatprep.subr.bf16.mxu0 0
    %621 = vmatpush1.bf16.msra.mxu0 0
    %622 = vmatprep.subr.bf16.mxu0 0
    %623 = vmatpush1.bf16.msra.mxu0 0
    %624 = vmatprep.subr.bf16.mxu0 0
    %625 = vmatpush1.bf16.msra.mxu0 0
    %626 = vmatprep.subr.bf16.mxu0 0
    %627 = vmatpush1.bf16.msra.mxu0 0
    %628 = vmatprep.subr.bf16.mxu0 0
    %629 = vmatpush1.bf16.msra.mxu0 0
    %630 = vmatprep.subr.bf16.mxu0 0
    %631 = vmatpush1.bf16.msra.mxu0 0
    %632 = vmatprep.subr.bf16.mxu0 0
    %633 = vmatpush1.bf16.msra.mxu0 0
    %634 = vmatprep.mubr.bf16.mxu0 0
    %635 = vmatmul.mubr.bf16.gmra.mrb[0].mxu0 %v227
    %v636 = vpop.f32.mrb[0].mxu0
    %v637 = vadd.f32 0.0, %v636
    %v638 = vpop.f32.mrb[0].mxu0
    %v639 = vpop.f32.mrb[0].mxu0
    %v640 = vadd.f32 0.0, %v639
    %v641 = vpop.f32.mrb[0].mxu0
    %642 = vdwg.mxu0
    %643 = vmatprep.subr.bf16.mxu0 0
    %644 = vmatpush1.bf16.msra.mxu0 %v519
    %645 = vmatprep.subr.bf16.mxu0 0
    %646 = vmatpush1.bf16.msra.mxu0 0
    %647 = vmatprep.subr.bf16.mxu0 0
    %648 = vmatpush1.bf16.msra.mxu0 0
    %649 = vmatprep.subr.bf16.mxu0 0
    %650 = vmatpush1.bf16.msra.mxu0 0
    %651 = vmatprep.subr.bf16.mxu0 0
    %652 = vmatpush1.bf16.msra.mxu0 0
    %653 = vmatprep.subr.bf16.mxu0 0
    %654 = vmatpush1.bf16.msra.mxu0 0
    %655 = vmatprep.subr.bf16.mxu0 0
    %656 = vmatpush1.bf16.msra.mxu0 0
    %657 = vmatprep.subr.bf16.mxu0 0
    %658 = vmatpush1.bf16.msra.mxu0 0
    %659 = vmatprep.subr.bf16.mxu0 0
    %660 = vmatpush1.bf16.msra.mxu0 0
    %661 = vmatprep.subr.bf16.mxu0 0
    %662 = vmatpush1.bf16.msra.mxu0 0
    %663 = vmatprep.subr.bf16.mxu0 0
    %664 = vmatpush1.bf16.msra.mxu0 0
    %665 = vmatprep.subr.bf16.mxu0 0
    %666 = vmatpush1.bf16.msra.mxu0 0
    %667 = vmatprep.subr.bf16.mxu0 0
    %668 = vmatpush1.bf16.msra.mxu0 0
    %669 = vmatprep.subr.bf16.mxu0 0
    %670 = vmatpush1.bf16.msra.mxu0 0
    %671 = vmatprep.subr.bf16.mxu0 0
    %672 = vmatpush1.bf16.msra.mxu0 0
    %673 = vmatprep.subr.bf16.mxu0 0
    %674 = vmatpush1.bf16.msra.mxu0 0
    %675 = vmatprep.mubr.bf16.mxu0 0
    %676 = vmatmul.mubr.bf16.gmra.mrb[0].mxu0 %v282
    %v677 = vpop.f32.mrb[0].mxu0
    %v678 = vadd.f32 0.0, %v677
    %v679 = vpop.f32.mrb[0].mxu0
    %v680 = vpop.f32.mrb[0].mxu0
    %v681 = vadd.f32 0.0, %v680
    %v682 = vpop.f32.mrb[0].mxu0
    %683 = vdwg.mxu0
    %v684 = vpack.c.bf16 %v558, %v555
    %v685 = vpack.c.bf16 %v599, %v596
    %v686 = vpack.c.bf16 %v640, %v637
    %v687 = vpack.c.bf16 %v681, %v678
    %v688 = vld [vmem:[#allocation7] sm:$0xf]
    %v689 = vld [vmem:[#allocation7 + $0x4] sm:$0xf]
    %v690 = vld [vmem:[#allocation7 + $0x8] sm:$0xf]
    %v691 = vld [vmem:[#allocation7 + $0xc] sm:$0xf]
    %v692 = vld [vmem:[#allocation7 + $0x10] sm:$0xf]
    %v693 = vld [vmem:[#allocation7 + $0x14] sm:$0xf]
    %v694 = vld [vmem:[#allocation7 + $0x18] sm:$0xf]
    %v695 = vld [vmem:[#allocation7 + $0x1c] sm:$0xf]
    %v696 = vld [vmem:[%s5] sm:$0xf]
    %v697 = vld [vmem:[%s5 + $0x4] sm:$0xf]
    %v698 = vld [vmem:[%s5 + $0x8] sm:$0xf]
    %v699 = vld [vmem:[%s5 + $0xc] sm:$0xf]
    %v700 = vld [vmem:[%s5 + $0x10] sm:$0xf]
    %v701 = vld [vmem:[%s5 + $0x14] sm:$0xf]
    %v702 = vld [vmem:[%s5 + $0x18] sm:$0xf]
    %v703 = vld [vmem:[%s5 + $0x1c] sm:$0xf]
    %v712 = vunpack.c.l.b16 %v696
    %v713 = vunpack.c.l.b16 %v697
    %v714 = vunpack.c.l.b16 %v698
    %v715 = vunpack.c.l.b16 %v699
    %v716 = vunpack.c.l.b16 %v700
    %v717 = vunpack.c.l.b16 %v701
    %v718 = vunpack.c.l.b16 %v702
    %v719 = vunpack.c.l.b16 %v703
    %v720 = vpack.c.b16 %v713, %v712
    %v721 = vpack.c.b16 %v715, %v714
    %v722 = vpack.c.b16 %v717, %v716
    %v723 = vpack.c.b16 %v719, %v718
    %vm728 = vcmask 523264
    %v730 = vsel %vm728, %v516, 0
    %v733 = vsel %vm728, %v517, 0
    %v736 = vsel %vm728, %v518, 0
    %v739 = vsel %vm728, %v519, 0
    %741 = vmatprep.subr.bf16.mxu0 0
    %742 = vmatpush1.bf16.msra.mxu0 %v720
    %743 = vmatprep.subr.bf16.mxu0 0
    %744 = vmatpush1.bf16.msra.mxu0 %v721
    %745 = vmatprep.subr.bf16.mxu0 0
    %746 = vmatpush1.bf16.msra.mxu0 %v722
    %747 = vmatprep.subr.bf16.mxu0 0
    %748 = vmatpush1.bf16.msra.mxu0 %v723
    %749 = vmatprep.subr.bf16.mxu0 0
    %750 = vmatpush1.bf16.msra.mxu0 0
    %751 = vmatprep.subr.bf16.mxu0 0
    %752 = vmatpush1.bf16.msra.mxu0 0
    %753 = vmatprep.subr.bf16.mxu0 0
    %754 = vmatpush1.bf16.msra.mxu0 0
    %755 = vmatprep.subr.bf16.mxu0 0
    %756 = vmatpush1.bf16.msra.mxu0 0
    %757 = vmatprep.subr.bf16.mxu0 0
    %758 = vmatpush1.bf16.msra.mxu0 0
    %759 = vmatprep.subr.bf16.mxu0 0
    %760 = vmatpush1.bf16.msra.mxu0 0
    %761 = vmatprep.subr.bf16.mxu0 0
    %762 = vmatpush1.bf16.msra.mxu0 0
    %763 = vmatprep.subr.bf16.mxu0 0
    %764 = vmatpush1.bf16.msra.mxu0 0
    %765 = vmatprep.subr.bf16.mxu0 0
    %766 = vmatpush1.bf16.msra.mxu0 0
    %767 = vmatprep.subr.bf16.mxu0 0
    %768 = vmatpush1.bf16.msra.mxu0 0
    %769 = vmatprep.subr.bf16.mxu0 0
    %770 = vmatpush1.bf16.msra.mxu0 0
    %771 = vmatprep.subr.bf16.mxu0 0
    %772 = vmatpush1.bf16.msra.mxu0 0
    %773 = vmatprep.mubr.bf16.mxu0 0
    %774 = vmatmul.mubr.bf16.gmra.mrb[0].mxu0 %v730
    %v775 = vpop.f32.mrb[0].mxu0
    %v776 = vadd.f32 0.0, %v775
    %v777 = vpop.f32.mrb[0].mxu0
    %v778 = vpop.f32.mrb[0].mxu0
    %v779 = vadd.f32 0.0, %v778
    %v780 = vpop.f32.mrb[0].mxu0
    %781 = vmatprep.mubr.bf16.mxu0 0
    %782 = vmatmul.mubr.bf16.gmra.mrb[0].mxu0 %v733
    %v783 = vpop.f32.mrb[0].mxu0
    %v784 = vadd.f32 0.0, %v783
    %v785 = vpop.f32.mrb[0].mxu0
    %v786 = vpop.f32.mrb[0].mxu0
    %v787 = vadd.f32 0.0, %v786
    %v788 = vpop.f32.mrb[0].mxu0
    %789 = vmatprep.mubr.bf16.mxu0 0
    %790 = vmatmul.mubr.bf16.gmra.mrb[0].mxu0 %v736
    %v791 = vpop.f32.mrb[0].mxu0
    %v792 = vadd.f32 0.0, %v791
    %v793 = vpop.f32.mrb[0].mxu0
    %v794 = vpop.f32.mrb[0].mxu0
    %v795 = vadd.f32 0.0, %v794
    %v796 = vpop.f32.mrb[0].mxu0
    %797 = vmatprep.mubr.bf16.mxu0 0
    %798 = vmatmul.mubr.bf16.gmra.mrb[0].mxu0 %v739
    %v799 = vpop.f32.mrb[0].mxu0
    %v800 = vadd.f32 0.0, %v799
    %v801 = vpop.f32.mrb[0].mxu0
    %v802 = vpop.f32.mrb[0].mxu0
    %v803 = vadd.f32 0.0, %v802
    %v804 = vpop.f32.mrb[0].mxu0
    %805 = vdwg.mxu0
    %v814 = vunpack.c.l.b16 %v688
    %v815 = vunpack.c.l.b16 %v689
    %v816 = vunpack.c.l.b16 %v690
    %v817 = vunpack.c.l.b16 %v691
    %v818 = vunpack.c.l.b16 %v692
    %v819 = vunpack.c.l.b16 %v693
    %v820 = vunpack.c.l.b16 %v694
    %v821 = vunpack.c.l.b16 %v695
    %v822 = vpack.c.b16 %v815, %v814
    %v823 = vpack.c.b16 %v817, %v816
    %v824 = vpack.c.b16 %v819, %v818
    %v825 = vpack.c.b16 %v821, %v820
    %v831 = vsel %vm728, %v684, 0
    %v834 = vsel %vm728, %v685, 0
    %v837 = vsel %vm728, %v686, 0
    %v840 = vsel %vm728, %v687, 0
    %842 = vmatprep.subr.bf16.mxu0 0
    %843 = vmatpush1.bf16.msra.mxu0 %v822
    %844 = vmatprep.subr.bf16.mxu0 0
    %845 = vmatpush1.bf16.msra.mxu0 %v823
    %846 = vmatprep.subr.bf16.mxu0 0
    %847 = vmatpush1.bf16.msra.mxu0 %v824
    %848 = vmatprep.subr.bf16.mxu0 0
    %849 = vmatpush1.bf16.msra.mxu0 %v825
    %850 = vmatprep.subr.bf16.mxu0 0
    %851 = vmatpush1.bf16.msra.mxu0 0
    %852 = vmatprep.subr.bf16.mxu0 0
    %853 = vmatpush1.bf16.msra.mxu0 0
    %854 = vmatprep.subr.bf16.mxu0 0
    %855 = vmatpush1.bf16.msra.mxu0 0
    %856 = vmatprep.subr.bf16.mxu0 0
    %857 = vmatpush1.bf16.msra.mxu0 0
    %858 = vmatprep.subr.bf16.mxu0 0
    %859 = vmatpush1.bf16.msra.mxu0 0
    %860 = vmatprep.subr.bf16.mxu0 0
    %861 = vmatpush1.bf16.msra.mxu0 0
    %862 = vmatprep.subr.bf16.mxu0 0
    %863 = vmatpush1.bf16.msra.mxu0 0
    %864 = vmatprep.subr.bf16.mxu0 0
    %865 = vmatpush1.bf16.msra.mxu0 0
    %866 = vmatprep.subr.bf16.mxu0 0
    %867 = vmatpush1.bf16.msra.mxu0 0
    %868 = vmatprep.subr.bf16.mxu0 0
    %869 = vmatpush1.bf16.msra.mxu0 0
    %870 = vmatprep.subr.bf16.mxu0 0
    %871 = vmatpush1.bf16.msra.mxu0 0
    %872 = vmatprep.subr.bf16.mxu0 0
    %873 = vmatpush1.bf16.msra.mxu0 0
    %874 = vmatprep.mubr.bf16.mxu0 0
    %875 = vmatmul.mubr.bf16.gmra.mrb[0].mxu0 %v831
    %v876 = vpop.f32.mrb[0].mxu0
    %v877 = vadd.f32 %v776, %v876
    %v878 = vpop.f32.mrb[0].mxu0
    %v879 = vpop.f32.mrb[0].mxu0
    %v880 = vadd.f32 %v779, %v879
    %v881 = vpop.f32.mrb[0].mxu0
    %882 = vmatprep.mubr.bf16.mxu0 0
    %883 = vmatmul.mubr.bf16.gmra.mrb[0].mxu0 %v834
    %v884 = vpop.f32.mrb[0].mxu0
    %v885 = vadd.f32 %v784, %v884
    %v886 = vpop.f32.mrb[0].mxu0
    %v887 = vpop.f32.mrb[0].mxu0
    %v888 = vadd.f32 %v787, %v887
    %v889 = vpop.f32.mrb[0].mxu0
    %890 = vmatprep.mubr.bf16.mxu0 0
    %891 = vmatmul.mubr.bf16.gmra.mrb[0].mxu0 %v837
    %v892 = vpop.f32.mrb[0].mxu0
    %v893 = vadd.f32 %v792, %v892
    %v894 = vpop.f32.mrb[0].mxu0
    %v895 = vpop.f32.mrb[0].mxu0
    %v896 = vadd.f32 %v795, %v895
    %v897 = vpop.f32.mrb[0].mxu0
    %898 = vmatprep.mubr.bf16.mxu0 0
    %899 = vmatmul.mubr.bf16.gmra.mrb[0].mxu0 %v840
    %v900 = vpop.f32.mrb[0].mxu0
    %v901 = vadd.f32 %v800, %v900
    %v902 = vpop.f32.mrb[0].mxu0
    %v903 = vpop.f32.mrb[0].mxu0
    %v904 = vadd.f32 %v803, %v903
    %v905 = vpop.f32.mrb[0].mxu0
    %906 = vdwg.mxu0
    %v907 = vld [vmem:[%s7] sm:$0x1]
    %v909 = vlaneseq
    %v910 = vshrl.u32 %v909, 7
    %v911 = vsub.s32 0, %v910
    %v912 = vrot.slane %v907, %v911
    %v914 = vadd.f32 %v877, %v912
    %v915 = vadd.f32 %v880, %v912
    %v916 = vadd.f32 %v885, %v912
    %v917 = vadd.f32 %v888, %v912
    %v918 = vadd.f32 %v893, %v912
    %v919 = vadd.f32 %v896, %v912
    %v920 = vadd.f32 %v901, %v912
    %v921 = vadd.f32 %v904, %v912
    %v922 = vmax.f32 %v914, 0.0
    %v923 = vmax.f32 %v915, 0.0
    %v924 = vmax.f32 %v916, 0.0
    %v925 = vmax.f32 %v917, 0.0
    %v926 = vmax.f32 %v918, 0.0
    %v927 = vmax.f32 %v919, 0.0
    %v928 = vmax.f32 %v920, 0.0
    %v929 = vmax.f32 %v921, 0.0
    %v930 = vpack.c.bf16 %v923, %v922
    %v931 = vpack.c.bf16 %v925, %v924
    %v932 = vpack.c.bf16 %v927, %v926
    %v933 = vpack.c.bf16 %v929, %v928
    %v934 = vld [vmem:[#allocation8] sm:$0xf]
    %v935 = vld [vmem:[#allocation8 + $0x4] sm:$0xf]
    %v936 = vld [vmem:[#allocation8 + $0x8] sm:$0xf]
    %v937 = vld [vmem:[#allocation8 + $0xc] sm:$0xf]
    %v938 = vld [vmem:[#allocation8 + $0x10] sm:$0xf]
    %v939 = vld [vmem:[#allocation8 + $0x14] sm:$0xf]
    %v940 = vld [vmem:[#allocation8 + $0x18] sm:$0xf]
    %v941 = vld [vmem:[#allocation8 + $0x1c] sm:$0xf]
    %v942 = vld [vmem:[%s9] sm:$0x1]
    %v944 = vlaneseq
    %v945 = vshrl.u32 %v944, 7
    %v946 = vsub.s32 0, %v945
    %v947 = vrot.slane %v942, %v946
    %v957 = vunpack.c.l.b16 %v934
    %v958 = vunpack.c.l.b16 %v935
    %v959 = vunpack.c.l.b16 %v936
    %v960 = vunpack.c.l.b16 %v937
    %v961 = vunpack.c.l.b16 %v938
    %v962 = vunpack.c.l.b16 %v939
    %v963 = vunpack.c.l.b16 %v940
    %v964 = vunpack.c.l.b16 %v941
    %v965 = vpack.c.b16 %v958, %v957
    %v966 = vpack.c.b16 %v960, %v959
    %v967 = vpack.c.b16 %v962, %v961
    %v968 = vpack.c.b16 %v964, %v963
    %v974 = vsel %vm728, %v930, 0
    %v977 = vsel %vm728, %v931, 0
    %v980 = vsel %vm728, %v932, 0
    %v983 = vsel %vm728, %v933, 0
    %985 = vmatprep.subr.bf16.mxu0 0
    %986 = vmatpush1.bf16.msra.mxu0 %v965
    %987 = vmatprep.subr.bf16.mxu0 0
    %988 = vmatpush1.bf16.msra.mxu0 %v966
    %989 = vmatprep.subr.bf16.mxu0 0
    %990 = vmatpush1.bf16.msra.mxu0 %v967
    %991 = vmatprep.subr.bf16.mxu0 0
    %992 = vmatpush1.bf16.msra.mxu0 %v968
    %993 = vmatprep.subr.bf16.mxu0 0
    %994 = vmatpush1.bf16.msra.mxu0 0
    %995 = vmatprep.subr.bf16.mxu0 0
    %996 = vmatpush1.bf16.msra.mxu0 0
    %997 = vmatprep.subr.bf16.mxu0 0
    %998 = vmatpush1.bf16.msra.mxu0 0
    %999 = vmatprep.subr.bf16.mxu0 0
    %1000 = vmatpush1.bf16.msra.mxu0 0
    %1001 = vmatprep.subr.bf16.mxu0 0
    %1002 = vmatpush1.bf16.msra.mxu0 0
    %1003 = vmatprep.subr.bf16.mxu0 0
    %1004 = vmatpush1.bf16.msra.mxu0 0
    %1005 = vmatprep.subr.bf16.mxu0 0
    %1006 = vmatpush1.bf16.msra.mxu0 0
    %1007 = vmatprep.subr.bf16.mxu0 0
    %1008 = vmatpush1.bf16.msra.mxu0 0
    %1009 = vmatprep.subr.bf16.mxu0 0
    %1010 = vmatpush1.bf16.msra.mxu0 0
    %1011 = vmatprep.subr.bf16.mxu0 0
    %1012 = vmatpush1.bf16.msra.mxu0 0
    %1013 = vmatprep.subr.bf16.mxu0 0
    %1014 = vmatpush1.bf16.msra.mxu0 0
    %1015 = vmatprep.subr.bf16.mxu0 0
    %1016 = vmatpush1.bf16.msra.mxu0 0
    %1017 = vmatprep.mubr.bf16.mxu0 0
    %1018 = vmatmul.mubr.bf16.gmra.mrb[0].mxu0 %v974
    %v1019 = vpop.f32.mrb[0].mxu0
    %v1020 = vadd.f32 %v947, %v1019
    %v1021 = vpop.f32.mrb[0].mxu0
    %v1022 = vpop.f32.mrb[0].mxu0
    %v1023 = vadd.f32 %v947, %v1022
    %v1024 = vpop.f32.mrb[0].mxu0
    %1025 = vmatprep.mubr.bf16.mxu0 0
    %1026 = vmatmul.mubr.bf16.gmra.mrb[0].mxu0 %v977
    %v1027 = vpop.f32.mrb[0].mxu0
    %v1028 = vadd.f32 %v947, %v1027
    %v1029 = vpop.f32.mrb[0].mxu0
    %v1030 = vpop.f32.mrb[0].mxu0
    %v1031 = vadd.f32 %v947, %v1030
    %v1032 = vpop.f32.mrb[0].mxu0
    %1033 = vmatprep.mubr.bf16.mxu0 0
    %1034 = vmatmul.mubr.bf16.gmra.mrb[0].mxu0 %v980
    %v1035 = vpop.f32.mrb[0].mxu0
    %v1036 = vadd.f32 %v947, %v1035
    %v1037 = vpop.f32.mrb[0].mxu0
    %v1038 = vpop.f32.mrb[0].mxu0
    %v1039 = vadd.f32 %v947, %v1038
    %v1040 = vpop.f32.mrb[0].mxu0
    %1041 = vmatprep.mubr.bf16.mxu0 0
    %1042 = vmatmul.mubr.bf16.gmra.mrb[0].mxu0 %v983
    %v1043 = vpop.f32.mrb[0].mxu0
    %v1044 = vadd.f32 %v947, %v1043
    %v1045 = vpop.f32.mrb[0].mxu0
    %v1046 = vpop.f32.mrb[0].mxu0
    %v1047 = vadd.f32 %v947, %v1046
    %v1048 = vpop.f32.mrb[0].mxu0
    %1049 = vdwg.mxu0
    %1050 = vst [vmem:[#allocation10] sm:$0xff] %v1020
    %1051 = vst [vmem:[#allocation10 + $0x8] sm:$0xff] %v1023
    %1052 = vst [vmem:[#allocation10 + $0x10] sm:$0xff] %v1028
    %1053 = vst [vmem:[#allocation10 + $0x18] sm:$0xff] %v1031
    %1054 = vst [vmem:[#allocation10 + $0x20] sm:$0xff] %v1036
    %1055 = vst [vmem:[#allocation10 + $0x28] sm:$0xff] %v1039
    %1056 = vst [vmem:[#allocation10 + $0x30] sm:$0xff] %v1044
    %1057 = vst [vmem:[#allocation10 + $0x38] sm:$0xff] %v1047
    // Predicated region
    $region58: #{tpu_custom_call.1} parent=1 // pred_check
      _
    $region59: #{tpu_custom_call.1} parent=1 // pred_check_branch
      %1059 = sbr.rel (0) target = $region61
    $region60: #{tpu_custom_call.1} parent=1 // pred_region
      %s1061 = ssub.s32 1024, 1024
      %1062 = vsyncadd [#allocation4], %s1061
      %s1063 = sshll.u32 [#allocation10], 4
      %s1064 = int_to_ptr.vmem [resolvable:$true] %s1063
      %1069 = dma.vmem_to_hbm [thread:$0]  %s1064, 1024, %s10, [#allocation4], 128, 128, 8
    $region61: #{tpu_custom_call.1} parent=1 // pred_fallthru
      _
    // Predicated region
    $region62: #{tpu_custom_call.1} parent=1 // pred_check
      _
    $region63: #{tpu_custom_call.1} parent=1 // pred_check_branch
      %1071 = sbr.rel (0) target = $region65
    $region64: #{tpu_custom_call.1} parent=1 // pred_region
      %1072 = dma.done [#allocation4], 1024
    $region65: #{tpu_custom_call.1} parent=1 // pred_fallthru
      _
    %1073 = vsyncpa [#allocation3], 1
    %1074 = vsyncpa [#allocation6], 1
    %1075 = vsyncpa [#allocation9], 1
    %1076 = vsyncpa [#allocation4], 1

</llo_original>
